<compile_context>
chip_gen: v7x
topology: tpu7x:2x2x1
jax: 0.10.0
libtpu: 0.0.40
codegen_flags: <defaults>
</compile_context>

<pallas_src>
import functools

import jax
import jax.numpy as jnp
from jax.experimental import pallas as pl
from jax.experimental.pallas import tpu as pltpu


_LANE = 128
_SUBLANE = 8


def _round_up(x, m):
    return (x + m - 1) // m * m


def _pad2d(a, rows, cols):
    return jnp.pad(a, ((0, rows - a.shape[0]), (0, cols - a.shape[1])))


def _pad_bias(b, n):
    return jnp.pad(b, (0, n - b.shape[0])).reshape(1, n)


def _choose_m_tiling(m, tm=256):
    """Pick (padded M, tile_m) so tile_m | padded M and tile_m % 8 == 0."""
    if m >= tm:
        return _round_up(m, tm), tm
    mp = _round_up(m, _SUBLANE)
    return mp, mp


# ----------------------------------------------------------------------------
# Pallas kernels
# ----------------------------------------------------------------------------
def _matmul_bias_kernel(x_ref, w_ref, b_ref, o_ref, *, apply_relu):
    acc = jnp.dot(x_ref[...], w_ref[...], preferred_element_type=jnp.float32)
    acc = acc + b_ref[...]                       # (1, N) broadcasts over rows
    if apply_relu:
        acc = jnp.maximum(acc, 0.0)
    o_ref[...] = acc.astype(o_ref.dtype)


def _mlp_tail_kernel(x_ref, w3_ref, b3_ref, w4_ref, b4_ref, o_ref):
    h = jnp.dot(x_ref[...], w3_ref[...], preferred_element_type=jnp.float32)
    h = jnp.maximum(h + b3_ref[...], 0.0)
    out = jnp.dot(h, w4_ref[...], preferred_element_type=jnp.float32)
    o_ref[...] = (out + b4_ref[...]).astype(o_ref.dtype)


# ----------------------------------------------------------------------------
# Pallas wrappers
# ----------------------------------------------------------------------------
def matmul_bias(x, w_p, b_p, apply_relu=False, tm=256):
    """x: (M, Kp) f32, w_p: (Kp, Np) f32 (lane-padded), b_p: (1, Np) -> (M, Np)."""
    M, K = x.shape
    Kp, Np = w_p.shape
    assert K == Kp and K % _LANE == 0 and Np % _LANE == 0

    Mp, tile_m = _choose_m_tiling(M, tm)
    if Mp != M:
        x = jnp.pad(x, ((0, Mp - M), (0, 0)))

    kernel = functools.partial(_matmul_bias_kernel, apply_relu=apply_relu)
    out = pl.pallas_call(
        kernel,
        out_shape=jax.ShapeDtypeStruct((Mp, Np), jnp.float32),
        grid=(Mp // tile_m,),
        in_specs=[
            pl.BlockSpec((tile_m, K), lambda i: (i, 0)),
            pl.BlockSpec((Kp, Np), lambda i: (0, 0)),
            pl.BlockSpec((1, Np), lambda i: (0, 0)),
        ],
        out_specs=pl.BlockSpec((tile_m, Np), lambda i: (i, 0)),
        compiler_params=pltpu.CompilerParams(
            dimension_semantics=("parallel",)),
    )(x, w_p, b_p)
    return out[:M] if Mp != M else out


def mlp_tail(x, w3_p, b3_p, w4_p, b4_p, tm=256):
    """Fused Linear -> ReLU -> Linear.  All dims already lane-padded."""
    M, K = x.shape
    H = w3_p.shape[1]
    Np = w4_p.shape[1]
    assert K % _LANE == 0 and H % _LANE == 0 and Np % _LANE == 0
    assert w4_p.shape[0] == H

    Mp, tile_m = _choose_m_tiling(M, tm)
    if Mp != M:
        x = jnp.pad(x, ((0, Mp - M), (0, 0)))

    out = pl.pallas_call(
        _mlp_tail_kernel,
        out_shape=jax.ShapeDtypeStruct((Mp, Np), jnp.float32),
        grid=(Mp // tile_m,),
        in_specs=[
            pl.BlockSpec((tile_m, K), lambda i: (i, 0)),
            pl.BlockSpec((K, H), lambda i: (0, 0)),
            pl.BlockSpec((1, H), lambda i: (0, 0)),
            pl.BlockSpec((H, Np), lambda i: (0, 0)),
            pl.BlockSpec((1, Np), lambda i: (0, 0)),
        ],
        out_specs=pl.BlockSpec((tile_m, Np), lambda i: (i, 0)),
        compiler_params=pltpu.CompilerParams(
            dimension_semantics=("parallel",)),
    )(x, w3_p, b3_p, w4_p, b4_p)
    return out[:M] if Mp != M else out


# ----------------------------------------------------------------------------
# Layer glue (NHWC im2col; GEMM runs in Pallas)
# ----------------------------------------------------------------------------
def _im2col_nhwc(x, kh, kw, stride, padding):
    """x: (N, H, W, C) -> patches (N*OH*OW, KH*KW*C), column order (kh, kw, c)."""
    n, h, w, c = x.shape
    xp = jnp.pad(x, ((0, 0), (padding, padding), (padding, padding), (0, 0)))
    oh = (h + 2 * padding - kh) // stride + 1
    ow = (w + 2 * padding - kw) // stride + 1
    patches = []
    for i in range(kh):
        for j in range(kw):
            patches.append(
                xp[:, i:i + stride * oh:stride, j:j + stride * ow:stride, :])
    p = jnp.concatenate(patches, axis=-1)        # (n, oh, ow, kh*kw*c)
    return p.reshape(n * oh * ow, kh * kw * c), oh, ow


def conv2d_nhwc(x, wmat_p, bias_p, oc, kh, kw, stride, padding, apply_relu):
    """NHWC conv via im2col + Pallas GEMM.  Returns NHWC output."""
    n = x.shape[0]
    patches, oh, ow = _im2col_nhwc(x, kh, kw, stride, padding)
    kp = wmat_p.shape[0]
    if patches.shape[1] != kp:                   # zero-pad K up to lane multiple
        patches = jnp.pad(patches, ((0, 0), (0, kp - patches.shape[1])))
    out = matmul_bias(patches, wmat_p, bias_p, apply_relu)   # (n*oh*ow, Np)
    return out[:, :oc].reshape(n, oh, ow, oc)


# ----------------------------------------------------------------------------
# Synthetic "parsed ONNX" network: deterministic init + one-time weight prep
# ----------------------------------------------------------------------------
def init_params(key):
    def u(k, shape, fan_in):
        bound = 1.0 / jnp.sqrt(jnp.float32(fan_in))
        return jax.random.uniform(k, shape, jnp.float32, -bound, bound)

    ks = jax.random.split(key, 8)
    return {
        # Conv2d(3, 8, k=3, s=1, p=1)   (OIHW, PyTorch convention)
        "w1": u(ks[0], (8, 3, 3, 3), 3 * 3 * 3),
        "b1": u(ks[1], (8,), 3 * 3 * 3),
        # Conv2d(8, 8, k=3, s=2, p=1)
        "w2": u(ks[2], (8, 8, 3, 3), 8 * 3 * 3),
        "b2": u(ks[3], (8,), 8 * 3 * 3),
        # Linear(8*8*8=512, 64)
        "w3": u(ks[4], (64, 512), 512),
        "b3": u(ks[5], (64,), 512),
        # Linear(64, 10)
        "w4": u(ks[6], (10, 64), 64),
        "b4": u(ks[7], (10,), 64),
    }


def prepare_params(params):
    """One-time layout work: transpose, permute, and lane-pad all weights."""
    # Conv1: OIHW -> (kh*kw*c, oc), pad both dims to 128.
    w1 = params["w1"].transpose(2, 3, 1, 0).reshape(3 * 3 * 3, 8)
    # Conv2: OIHW -> (kh*kw*c, oc), pad both dims to 128.
    w2 = params["w2"].transpose(2, 3, 1, 0).reshape(3 * 3 * 8, 8)
    # Linear(512,64): permute input features from (c,h,w) [NCHW flatten] to
    # (h,w,c) [NHWC flatten] so NHWC-internal flatten keeps PyTorch semantics.
    c2, hh, ww = 8, 8, 8
    w3 = params["w3"].reshape(64, c2, hh, ww).transpose(0, 2, 3, 1)
    w3 = w3.reshape(64, c2 * hh * ww).T          # (512, 64)
    # Linear(64,10)
    w4 = params["w4"].T                          # (64, 10)

    return {
        "wm1": _pad2d(w1, _round_up(w1.shape[0], _LANE), _LANE),   # (128,128)
        "b1": _pad_bias(params["b1"], _LANE),
        "wm2": _pad2d(w2, _round_up(w2.shape[0], _LANE), _LANE),   # (128,128)
        "b2": _pad_bias(params["b2"], _LANE),
        "w3": _pad2d(w3, 512, _LANE),                              # (512,128)
        "b3": _pad_bias(params["b3"], _LANE),
        "w4": _pad2d(w4, _LANE, _LANE),                            # (128,128)
        "b4": _pad_bias(params["b4"], _LANE),
    }


def onnx_parser_forward(prep, x_nchw):
    """Equivalent of ONNXParser.forward(x) == self.layers(x)."""
    x = x_nchw.transpose(0, 2, 3, 1)             # NCHW -> NHWC, once, at boundary
    h = conv2d_nhwc(x, prep["wm1"], prep["b1"], oc=8, kh=3, kw=3,
                    stride=1, padding=1, apply_relu=True)
    h = conv2d_nhwc(h, prep["wm2"], prep["b2"], oc=8, kh=3, kw=3,
                    stride=2, padding=1, apply_relu=True)
    h = h.reshape(h.shape[0], -1)                # Flatten (NHWC order; w3 permuted)
    out = mlp_tail(h, prep["w3"], prep["b3"], prep["w4"], prep["b4"])
    return out[:, :10]


# Pure-JAX reference (NCHW, same math, no Pallas) used as a correctness check.
def _reference_forward(params, x):
    def conv_ref(x, w, b, stride, padding):
        y = jax.lax.conv_general_dilated(
            x, w, window_strides=(stride, stride),
            padding=[(padding, padding), (padding, padding)],
            dimension_numbers=("NCHW", "OIHW", "NCHW"))
        return y + b.reshape(1, -1, 1, 1)

    h = jnp.maximum(conv_ref(x, params["w1"], params["b1"], 1, 1), 0.0)
    h = jnp.maximum(conv_ref(h, params["w2"], params["b2"], 2, 1), 0.0)
    h = h.reshape(h.shape[0], -1)
    h = jnp.maximum(h @ params["w3"].T + params["b3"], 0.0)
    h = h @ params["w4"].T + params["b4"]
    return h


if __name__ == "__main__":
    key = jax.random.PRNGKey(0)
    k_param, k_x = jax.random.split(key)
    params = init_params(k_param)
    prep = jax.tree_util.tree_map(jax.device_put, prepare_params(params))
    x = jax.random.normal(k_x, (2, 3, 16, 16), jnp.float32)   # NCHW input

    fwd = jax.jit(onnx_parser_forward)
    out = jax.block_until_ready(fwd(prep, x))

    ref = jax.block_until_ready(_reference_forward(params, x))
    assert out.shape == (2, 10)
    assert jnp.allclose(out, ref, atol=1e-4, rtol=1e-4), "Pallas output mismatch"

    print("KERNEL_OK")
</pallas_src>

<mosaic_0001>
module attributes {stable_mosaic.version = 11 : i64} {
  func.func @_matmul_bias_kernel(%arg0: i32, %arg1: memref<256x128xf32, #tpu.memory_space<vmem>>, %arg2: memref<128x128xf32, #tpu.memory_space<vmem>>, %arg3: memref<1x128xf32, #tpu.memory_space<vmem>>, %arg4: memref<256x128xf32, #tpu.memory_space<vmem>>) attributes {dimension_semantics = [#tpu.dimension_semantics<parallel>], iteration_bounds = array<i64: 2>, scalar_prefetch = 0 : i64, scratch_operands = 0 : i64, tpu.core_type = #tpu.core_type<tc>, window_params = [{transform_indices = @transform_0, window_bounds = array<i64: 256, 128>}, {pipeline_mode = #tpu.pipeline_mode<synchronous>, transform_indices = @transform_1, window_bounds = array<i64: 128, 128>}, {pipeline_mode = #tpu.pipeline_mode<synchronous>, transform_indices = @transform_2, window_bounds = array<i64: 1, 128>}, {transform_indices = @transform_3, window_bounds = array<i64: 256, 128>}]} {
    %c0 = arith.constant 0 : index
    %c0_0 = arith.constant 0 : index
    %0 = vector.load %arg1[%c0, %c0_0] : memref<256x128xf32, #tpu.memory_space<vmem>>, vector<256x128xf32>
    %c0_1 = arith.constant 0 : index
    %c0_2 = arith.constant 0 : index
    %1 = vector.load %arg2[%c0_1, %c0_2] : memref<128x128xf32, #tpu.memory_space<vmem>>, vector<128x128xf32>
    %cst = arith.constant dense<0.000000e+00> : vector<256x128xf32>
    %2 = tpu.matmul %0, %1, %cst {dimension_numbers = #tpu.dot_dimension_numbers<[1], [0], [0], [1], [0, 0, 1, 1], [], []>} : vector<256x128xf32>, vector<128x128xf32>, vector<256x128xf32> -> vector<256x128xf32>
    %c0_3 = arith.constant 0 : index
    %c0_4 = arith.constant 0 : index
    %3 = vector.load %arg3[%c0_3, %c0_4] : memref<1x128xf32, #tpu.memory_space<vmem>>, vector<1x128xf32>
    %4 = vector.broadcast %3 : vector<1x128xf32> to vector<256x128xf32>
    %5 = arith.addf %2, %4 : vector<256x128xf32>
    %cst_5 = arith.constant 0.000000e+00 : f32
    %6 = vector.broadcast %cst_5 : f32 to vector<256x128xf32>
    %7 = arith.maximumf %5, %6 : vector<256x128xf32>
    %c0_6 = arith.constant 0 : index
    %c0_7 = arith.constant 0 : index
    %8 = vector.load %arg4[%c0_6, %c0_7] : memref<256x128xf32, #tpu.memory_space<vmem>>, vector<256x128xf32>
    tpu.vector_store %arg4[%c0_6, %c0_7], %7 {strides = array<i32>} : memref<256x128xf32, #tpu.memory_space<vmem>>, vector<256x128xf32>,
    return
  }
  func.func @transform_0(%arg0: i32) -> (i32, i32) {
    %c0_i32 = arith.constant 0 : i32
    %c0_i32_0 = arith.constant 0 : i32
    return %arg0, %c0_i32 : i32, i32
  }
  func.func @transform_1(%arg0: i32) -> (i32, i32) {
    %c0_i32 = arith.constant 0 : i32
    %c0_i32_0 = arith.constant 0 : i32
    %c0_i32_1 = arith.constant 0 : i32
    return %c0_i32, %c0_i32_0 : i32, i32
  }
  func.func @transform_2(%arg0: i32) -> (i32, i32) {
    %c0_i32 = arith.constant 0 : i32
    %c0_i32_0 = arith.constant 0 : i32
    %c0_i32_1 = arith.constant 0 : i32
    return %c0_i32, %c0_i32_0 : i32, i32
  }
  func.func @transform_3(%arg0: i32) -> (i32, i32) {
    %c0_i32 = arith.constant 0 : i32
    %c0_i32_0 = arith.constant 0 : i32
    return %arg0, %c0_i32 : i32, i32
  }
}

module attributes {stable_mosaic.version = 11 : i64} {
  func.func @_matmul_bias_kernel(%arg0: i32, %arg1: memref<128x128xf32, #tpu.memory_space<vmem>>, %arg2: memref<128x128xf32, #tpu.memory_space<vmem>>, %arg3: memref<1x128xf32, #tpu.memory_space<vmem>>, %arg4: memref<128x128xf32, #tpu.memory_space<vmem>>) attributes {dimension_semantics = [#tpu.dimension_semantics<parallel>], iteration_bounds = array<i64: 1>, scalar_prefetch = 0 : i64, scratch_operands = 0 : i64, tpu.core_type = #tpu.core_type<tc>, window_params = [{transform_indices = @transform_0, window_bounds = array<i64: 128, 128>}, {pipeline_mode = #tpu.pipeline_mode<synchronous>, transform_indices = @transform_1, window_bounds = array<i64: 128, 128>}, {pipeline_mode = #tpu.pipeline_mode<synchronous>, transform_indices = @transform_2, window_bounds = array<i64: 1, 128>}, {transform_indices = @transform_3, window_bounds = array<i64: 128, 128>}]} {
    %c0 = arith.constant 0 : index
    %c0_0 = arith.constant 0 : index
    %0 = vector.load %arg1[%c0, %c0_0] : memref<128x128xf32, #tpu.memory_space<vmem>>, vector<128x128xf32>
    %c0_1 = arith.constant 0 : index
    %c0_2 = arith.constant 0 : index
    %1 = vector.load %arg2[%c0_1, %c0_2] : memref<128x128xf32, #tpu.memory_space<vmem>>, vector<128x128xf32>
    %cst = arith.constant dense<0.000000e+00> : vector<128x128xf32>
    %2 = tpu.matmul %0, %1, %cst {dimension_numbers = #tpu.dot_dimension_numbers<[1], [0], [0], [1], [0, 0, 1, 1], [], []>} : vector<128x128xf32>, vector<128x128xf32>, vector<128x128xf32> -> vector<128x128xf32>
    %c0_3 = arith.constant 0 : index
    %c0_4 = arith.constant 0 : index
    %3 = vector.load %arg3[%c0_3, %c0_4] : memref<1x128xf32, #tpu.memory_space<vmem>>, vector<1x128xf32>
    %4 = vector.broadcast %3 : vector<1x128xf32> to vector<128x128xf32>
    %5 = arith.addf %2, %4 : vector<128x128xf32>
    %cst_5 = arith.constant 0.000000e+00 : f32
    %6 = vector.broadcast %cst_5 : f32 to vector<128x128xf32>
    %7 = arith.maximumf %5, %6 : vector<128x128xf32>
    %c0_6 = arith.constant 0 : index
    %c0_7 = arith.constant 0 : index
    %8 = vector.load %arg4[%c0_6, %c0_7] : memref<128x128xf32, #tpu.memory_space<vmem>>, vector<128x128xf32>
    tpu.vector_store %arg4[%c0_6, %c0_7], %7 {strides = array<i32>} : memref<128x128xf32, #tpu.memory_space<vmem>>, vector<128x128xf32>,
    return
  }
  func.func @transform_0(%arg0: i32) -> (i32, i32) {
    %c0_i32 = arith.constant 0 : i32
    %c0_i32_0 = arith.constant 0 : i32
    return %arg0, %c0_i32 : i32, i32
  }
  func.func @transform_1(%arg0: i32) -> (i32, i32) {
    %c0_i32 = arith.constant 0 : i32
    %c0_i32_0 = arith.constant 0 : i32
    %c0_i32_1 = arith.constant 0 : i32
    return %c0_i32, %c0_i32_0 : i32, i32
  }
  func.func @transform_2(%arg0: i32) -> (i32, i32) {
    %c0_i32 = arith.constant 0 : i32
    %c0_i32_0 = arith.constant 0 : i32
    %c0_i32_1 = arith.constant 0 : i32
    return %c0_i32, %c0_i32_0 : i32, i32
  }
  func.func @transform_3(%arg0: i32) -> (i32, i32) {
    %c0_i32 = arith.constant 0 : i32
    %c0_i32_0 = arith.constant 0 : i32
    return %arg0, %c0_i32 : i32, i32
  }
}

module attributes {stable_mosaic.version = 11 : i64} {
  func.func @_mlp_tail_kernel(%arg0: i32, %arg1: memref<8x512xf32, #tpu.memory_space<vmem>>, %arg2: memref<512x128xf32, #tpu.memory_space<vmem>>, %arg3: memref<1x128xf32, #tpu.memory_space<vmem>>, %arg4: memref<128x128xf32, #tpu.memory_space<vmem>>, %arg5: memref<1x128xf32, #tpu.memory_space<vmem>>, %arg6: memref<8x128xf32, #tpu.memory_space<vmem>>) attributes {dimension_semantics = [#tpu.dimension_semantics<parallel>], iteration_bounds = array<i64: 1>, scalar_prefetch = 0 : i64, scratch_operands = 0 : i64, tpu.core_type = #tpu.core_type<tc>, window_params = [{transform_indices = @transform_0, window_bounds = array<i64: 8, 512>}, {pipeline_mode = #tpu.pipeline_mode<synchronous>, transform_indices = @transform_1, window_bounds = array<i64: 512, 128>}, {pipeline_mode = #tpu.pipeline_mode<synchronous>, transform_indices = @transform_2, window_bounds = array<i64: 1, 128>}, {pipeline_mode = #tpu.pipeline_mode<synchronous>, transform_indices = @transform_3, window_bounds = array<i64: 128, 128>}, {pipeline_mode = #tpu.pipeline_mode<synchronous>, transform_indices = @transform_4, window_bounds = array<i64: 1, 128>}, {transform_indices = @transform_5, window_bounds = array<i64: 8, 128>}]} {
    %c0 = arith.constant 0 : index
    %c0_0 = arith.constant 0 : index
    %0 = vector.load %arg1[%c0, %c0_0] : memref<8x512xf32, #tpu.memory_space<vmem>>, vector<8x512xf32>
    %c0_1 = arith.constant 0 : index
    %c0_2 = arith.constant 0 : index
    %1 = vector.load %arg2[%c0_1, %c0_2] : memref<512x128xf32, #tpu.memory_space<vmem>>, vector<512x128xf32>
    %cst = arith.constant dense<0.000000e+00> : vector<8x128xf32>
    %2 = tpu.matmul %0, %1, %cst {dimension_numbers = #tpu.dot_dimension_numbers<[1], [0], [0], [1], [0, 0, 1, 1], [], []>} : vector<8x512xf32>, vector<512x128xf32>, vector<8x128xf32> -> vector<8x128xf32>
    %c0_3 = arith.constant 0 : index
    %c0_4 = arith.constant 0 : index
    %3 = vector.load %arg3[%c0_3, %c0_4] : memref<1x128xf32, #tpu.memory_space<vmem>>, vector<1x128xf32>
    %4 = vector.broadcast %3 : vector<1x128xf32> to vector<8x128xf32>
    %5 = arith.addf %2, %4 : vector<8x128xf32>
    %cst_5 = arith.constant 0.000000e+00 : f32
    %6 = vector.broadcast %cst_5 : f32 to vector<8x128xf32>
    %7 = arith.maximumf %5, %6 : vector<8x128xf32>
    %c0_6 = arith.constant 0 : index
    %c0_7 = arith.constant 0 : index
    %8 = vector.load %arg4[%c0_6, %c0_7] : memref<128x128xf32, #tpu.memory_space<vmem>>, vector<128x128xf32>
    %cst_8 = arith.constant dense<0.000000e+00> : vector<8x128xf32>
    %9 = tpu.matmul %7, %8, %cst_8 {dimension_numbers = #tpu.dot_dimension_numbers<[1], [0], [0], [1], [0, 0, 1, 1], [], []>} : vector<8x128xf32>, vector<128x128xf32>, vector<8x128xf32> -> vector<8x128xf32>
    %c0_9 = arith.constant 0 : index
    %c0_10 = arith.constant 0 : index
    %10 = vector.load %arg5[%c0_9, %c0_10] : memref<1x128xf32, #tpu.memory_space<vmem>>, vector<1x128xf32>
    %11 = vector.broadcast %10 : vector<1x128xf32> to vector<8x128xf32>
    %12 = arith.addf %9, %11 : vector<8x128xf32>
    %c0_11 = arith.constant 0 : index
    %c0_12 = arith.constant 0 : index
    %13 = vector.load %arg6[%c0_11, %c0_12] : memref<8x128xf32, #tpu.memory_space<vmem>>, vector<8x128xf32>
    tpu.vector_store %arg6[%c0_11, %c0_12], %12 {strides = array<i32>} : memref<8x128xf32, #tpu.memory_space<vmem>>, vector<8x128xf32>,
    return
  }
  func.func @transform_0(%arg0: i32) -> (i32, i32) {
    %c0_i32 = arith.constant 0 : i32
    %c0_i32_0 = arith.constant 0 : i32
    return %arg0, %c0_i32 : i32, i32
  }
  func.func @transform_1(%arg0: i32) -> (i32, i32) {
    %c0_i32 = arith.constant 0 : i32
    %c0_i32_0 = arith.constant 0 : i32
    %c0_i32_1 = arith.constant 0 : i32
    return %c0_i32, %c0_i32_0 : i32, i32
  }
  func.func @transform_2(%arg0: i32) -> (i32, i32) {
    %c0_i32 = arith.constant 0 : i32
    %c0_i32_0 = arith.constant 0 : i32
    %c0_i32_1 = arith.constant 0 : i32
    return %c0_i32, %c0_i32_0 : i32, i32
  }
  func.func @transform_3(%arg0: i32) -> (i32, i32) {
    %c0_i32 = arith.constant 0 : i32
    %c0_i32_0 = arith.constant 0 : i32
    %c0_i32_1 = arith.constant 0 : i32
    return %c0_i32, %c0_i32_0 : i32, i32
  }
  func.func @transform_4(%arg0: i32) -> (i32, i32) {
    %c0_i32 = arith.constant 0 : i32
    %c0_i32_0 = arith.constant 0 : i32
    %c0_i32_1 = arith.constant 0 : i32
    return %c0_i32, %c0_i32_0 : i32, i32
  }
  func.func @transform_5(%arg0: i32) -> (i32, i32) {
    %c0_i32 = arith.constant 0 : i32
    %c0_i32_0 = arith.constant 0 : i32
    return %arg0, %c0_i32 : i32, i32
  }
}

</mosaic_0001>

<llo_original>
// kernel: onnx_parser_forward.3
$region0: #{onnx_parser_forward.3}
  #allocation0 [shape = 'u32[]', space=smem, size = 0x4, offset = 0x4, fixed_abs, tag = 'smem constant byte address 0x4 - core index']
  #allocation1 [shape = 'u32[144,128]{1,0:T(1,128)}', space=vmem, size = 0x12000, scoped, tag = 'internal scratch']
  %s0 = inlined_call_operand.vmem [shape: f32[512,128], index: 0, kind: input, shape index: {}]
  %s1 = inlined_call_operand.vmem [shape: f32[128,128], index: 1, kind: input, shape index: {}]
  %s2 = inlined_call_operand.vmem [shape: f32[1,128], index: 2, kind: input, shape index: {}]
  %s3 = inlined_call_operand.vmem [shape: f32[512,128], index: 3, kind: output, shape index: {}]
  %s4 = sld [smem:[#allocation0]]
  $region45: #{onnx_parser_forward.3} parent=0
    _
  %s6 = ssub.s32 1, %s4
  %s7 = scalar_select 0, %s6, %s4
  loop: start=0, step=1, limit=4
  $region2: #{onnx_parser_forward.3} parent=0 // loop_pre_header
    _
  $region3: #{onnx_parser_forward.3} parent=0 // loop_header
    %s9 = sphi 0, %s13
    %p10 = scmp.ge.s32.totalorder %s9, 4
    %s19 = sphi 0, %s21
    %s22 = sphi 0, %s19
    %s23 = sphi 0, %s22
    %s39 = sphi 0, %s23
    %s43 = sphi 0, %s43
    %s45 = sphi 0, %s43
    %s46 = sphi 0, %s45
    %s60 = sphi 0, %s46
    %s64 = sphi 0, %s64
    %s66 = sphi 0, %s64
    %s67 = sphi 0, %s66
    %s81 = sphi 0, %s67
    %s87 = sphi 0, %s89
    %s90 = sphi 0, %s87
    %s91 = sphi 0, %s90
    %s107 = sphi 0, %s91
  $region4: #{onnx_parser_forward.3} parent=0 // loop_header_branch
    %12 = sbr.rel (%p10) target = $region8
  $region5: #{onnx_parser_forward.3} parent=0 // loop_body
    %s14 = ssub.s32 %s9, 1
    %s15 = ssub.s32 %s9, 2
    %s16 = sadd.s32 %s9, 1
    %s17 = ssub.s32 %s9, %s16
    %p18 = scmp.eq.s32.totalorder %s17, 0
    %s20 = sadd.s32 %s19, 1
    %s21 = scalar_select %p18, %s19, %s20
    %p24 = pneg %p18
    %p25 = scmp.eq.s32.totalorder %s9, 1
    %p26 = por %p24, %p25
    %p27 = scmp.ne.s32.totalorder %s19, %s22
    %p28 = scmp.eq.s32.totalorder %s9, 0
    %p29 = por %p27, %p28
    %p30 = scmp.ne.s32.totalorder %s19, %s22
    %p31 = scmp.eq.s32.totalorder %s14, 1
    %p32 = por %p30, %p31
    %p33 = scmp.ne.s32.totalorder %s22, %s23
    %p34 = scmp.eq.s32.totalorder %s14, 0
    %p35 = por %p33, %p34
    %p36 = scmp.ne.s32.totalorder %s22, %s23
    %p37 = scmp.eq.s32.totalorder %s15, 1
    %p38 = por %p36, %p37
    %p40 = scmp.ne.s32.totalorder %s23, %s39
    %p41 = scmp.eq.s32.totalorder %s15, 0
    %p42 = por %p40, %p41
    %s44 = sadd.s32 %s43, 1
    %p47 = scmp.eq.s32.totalorder %s9, 1
    %p48 = scmp.ne.s32.totalorder %s43, %s45
    %p49 = scmp.eq.s32.totalorder %s9, 0
    %p50 = por %p48, %p49
    %p51 = scmp.ne.s32.totalorder %s43, %s45
    %p52 = scmp.eq.s32.totalorder %s14, 1
    %p53 = por %p51, %p52
    %p54 = scmp.ne.s32.totalorder %s45, %s46
    %p55 = scmp.eq.s32.totalorder %s14, 0
    %p56 = por %p54, %p55
    %p57 = scmp.ne.s32.totalorder %s45, %s46
    %p58 = scmp.eq.s32.totalorder %s15, 1
    %p59 = por %p57, %p58
    %p61 = scmp.ne.s32.totalorder %s46, %s60
    %p62 = scmp.eq.s32.totalorder %s15, 0
    %p63 = por %p61, %p62
    %s65 = sadd.s32 %s64, 1
    %p68 = scmp.eq.s32.totalorder %s9, 1
    %p69 = scmp.ne.s32.totalorder %s64, %s66
    %p70 = scmp.eq.s32.totalorder %s9, 0
    %p71 = por %p69, %p70
    %p72 = scmp.ne.s32.totalorder %s64, %s66
    %p73 = scmp.eq.s32.totalorder %s14, 1
    %p74 = por %p72, %p73
    %p75 = scmp.ne.s32.totalorder %s66, %s67
    %p76 = scmp.eq.s32.totalorder %s14, 0
    %p77 = por %p75, %p76
    %p78 = scmp.ne.s32.totalorder %s66, %s67
    %p79 = scmp.eq.s32.totalorder %s15, 1
    %p80 = por %p78, %p79
    %p82 = scmp.ne.s32.totalorder %s67, %s81
    %p83 = scmp.eq.s32.totalorder %s15, 0
    %p84 = por %p82, %p83
    %s85 = ssub.s32 %s9, %s16
    %p86 = scmp.eq.s32.totalorder %s85, 0
    %s88 = sadd.s32 %s87, 1
    %s89 = scalar_select %p86, %s87, %s88
    %p92 = pneg %p86
    %p93 = scmp.eq.s32.totalorder %s9, 1
    %p94 = por %p92, %p93
    %p95 = scmp.ne.s32.totalorder %s87, %s90
    %p96 = scmp.eq.s32.totalorder %s9, 0
    %p97 = por %p95, %p96
    %p98 = scmp.ne.s32.totalorder %s87, %s90
    %p99 = scmp.eq.s32.totalorder %s14, 1
    %p100 = por %p98, %p99
    %p101 = scmp.ne.s32.totalorder %s90, %s91
    %p102 = scmp.eq.s32.totalorder %s14, 0
    %p103 = por %p101, %p102
    %p104 = scmp.ne.s32.totalorder %s90, %s91
    %p105 = scmp.eq.s32.totalorder %s15, 1
    %p106 = por %p104, %p105
    %p108 = scmp.ne.s32.totalorder %s91, %s107
    %p109 = scmp.eq.s32.totalorder %s15, 0
    %p110 = por %p108, %p109
    %p111 = scmp.le.s32.totalorder 1, %s9
    %p112 = scmp.lt.s32.totalorder %s9, 3
    %p113 = pnand %p111, %p112
    %p114 = pneg %p113
    // Predicated region
    $region9: #{onnx_parser_forward.3} parent=5 // pred_check
      _
    $region10: #{onnx_parser_forward.3} parent=5 // pred_check_branch
      %116 = sbr.rel (%p113) target = $region12
    $region11: #{onnx_parser_forward.3} parent=5 // pred_region
      %s117 = ssub.s32 %s9, 1
      // Predicated region
      $region13: #{onnx_parser_forward.3} parent=11 // pred_check
        %p118 = pneg %p56
      $region14: #{onnx_parser_forward.3} parent=11 // pred_check_branch
        %120 = sbr.rel (%p118) target = $region16
      $region15: #{onnx_parser_forward.3} parent=11 // pred_region
        _
      $region16: #{onnx_parser_forward.3} parent=11 // pred_fallthru
        _
      // Predicated region
      $region17: #{onnx_parser_forward.3} parent=11 // pred_check
        %p121 = pneg %p77
      $region18: #{onnx_parser_forward.3} parent=11 // pred_check_branch
        %123 = sbr.rel (%p121) target = $region20
      $region19: #{onnx_parser_forward.3} parent=11 // pred_region
        _
      $region20: #{onnx_parser_forward.3} parent=11 // pred_fallthru
        _
    $region12: #{onnx_parser_forward.3} parent=5 // pred_fallthru
      _
    %p124 = scmp.lt.s32.totalorder %s9, 2
    // Predicated region
    $region21: #{onnx_parser_forward.3} parent=5 // pred_check
      %p125 = pneg %p124
    $region22: #{onnx_parser_forward.3} parent=5 // pred_check_branch
      %127 = sbr.rel (%p125) target = $region24
    $region23: #{onnx_parser_forward.3} parent=5 // pred_region
      // Predicated region
      $region25: #{onnx_parser_forward.3} parent=23 // pred_check
        %p128 = pneg %p29
      $region26: #{onnx_parser_forward.3} parent=23 // pred_check_branch
        %130 = sbr.rel (%p128) target = $region28
      $region27: #{onnx_parser_forward.3} parent=23 // pred_region
        %s131 = smul.u32 32, %s9
        %p132 = scmp.lt.s32.totalorder %s131, 63
        %s133 = scalar_select %p132, %s131, 63
        %s134 = smul.addr %s133, 8
        %s135 = scalar_lea.vmem %s0, %s134
        %s136 = smul.u32 32, %s9
      $region28: #{onnx_parser_forward.3} parent=23 // pred_fallthru
        _
    $region24: #{onnx_parser_forward.3} parent=5 // pred_fallthru
      _
    %p137 = scmp.le.s32.totalorder 1, %s9
    %p138 = scmp.lt.s32.totalorder %s9, 3
    %p139 = pnand %p137, %p138
    %p140 = pneg %p139
    // Predicated region
    $region29: #{onnx_parser_forward.3} parent=5 // pred_check
      _
    $region30: #{onnx_parser_forward.3} parent=5 // pred_check_branch
      %142 = sbr.rel (%p139) target = $region32
    $region31: #{onnx_parser_forward.3} parent=5 // pred_region
      %s143 = ssub.s32 %s9, 1
      %s144 = smul.u32 32, %s14
      %p145 = scmp.lt.s32.totalorder %s144, 63
      %s146 = scalar_select %p145, %s144, 63
      %s147 = smul.addr %s146, 8
      %s148 = scalar_lea.vmem %s0, %s147
      %p149 = pneg %p35
      %p150 = pneg %p32
      %p151 = pneg %p56
      %p152 = pneg %p53
      %p153 = pneg %p77
      %p154 = pneg %p74
      %p155 = pneg %p103
      %p156 = pneg %p100
      %s157 = smul.u32 32, %s14
      %p158 = scmp.lt.s32.totalorder %s157, 63
      %s159 = scalar_select %p158, %s157, 63
      %s160 = smul.addr %s159, 8
      %s161 = scalar_lea.vmem %s3, %s160
      %s162 = smul.u32 32, %s14
      %p163 = scmp.lt.s32.totalorder %s162, 63
      %s164 = scalar_select %p163, %s162, 63
      %s165 = smul.addr %s164, 8
      %s166 = scalar_lea.vmem %s0, %s165
      %s167 = smul.u32 32, %s14
      %s168 = smul.u32 32, %s14
      %p169 = scmp.lt.s32.totalorder %s168, 63
      %s170 = scalar_select %p169, %s168, 63
      %s171 = smul.addr %s170, 8
      %s172 = scalar_lea.vmem %s3, %s171
      %s173 = smul.u32 32, %s14
      %v174 = vld [vmem:[%s166] sm:$0xff]
      %v175 = vld [vmem:[%s166 + $0x8] sm:$0xff]
      %v176 = vld [vmem:[%s166 + $0x10] sm:$0xff]
      %v177 = vld [vmem:[%s166 + $0x18] sm:$0xff]
      %v178 = vld [vmem:[%s166 + $0x20] sm:$0xff]
      %v179 = vld [vmem:[%s166 + $0x28] sm:$0xff]
      %v180 = vld [vmem:[%s166 + $0x30] sm:$0xff]
      %v181 = vld [vmem:[%s166 + $0x38] sm:$0xff]
      %v182 = vld [vmem:[%s166 + $0x40] sm:$0xff]
      %v183 = vld [vmem:[%s166 + $0x48] sm:$0xff]
      %v184 = vld [vmem:[%s166 + $0x50] sm:$0xff]
      %v185 = vld [vmem:[%s166 + $0x58] sm:$0xff]
      %v186 = vld [vmem:[%s166 + $0x60] sm:$0xff]
      %v187 = vld [vmem:[%s166 + $0x68] sm:$0xff]
      %v188 = vld [vmem:[%s166 + $0x70] sm:$0xff]
      %v189 = vld [vmem:[%s166 + $0x78] sm:$0xff]
      %v190 = vld [vmem:[%s166 + $0x80] sm:$0xff]
      %v191 = vld [vmem:[%s166 + $0x88] sm:$0xff]
      %v192 = vld [vmem:[%s166 + $0x90] sm:$0xff]
      %v193 = vld [vmem:[%s166 + $0x98] sm:$0xff]
      %v194 = vld [vmem:[%s166 + $0xa0] sm:$0xff]
      %v195 = vld [vmem:[%s166 + $0xa8] sm:$0xff]
      %v196 = vld [vmem:[%s166 + $0xb0] sm:$0xff]
      %v197 = vld [vmem:[%s166 + $0xb8] sm:$0xff]
      %v198 = vld [vmem:[%s166 + $0xc0] sm:$0xff]
      %v199 = vld [vmem:[%s166 + $0xc8] sm:$0xff]
      %v200 = vld [vmem:[%s166 + $0xd0] sm:$0xff]
      %v201 = vld [vmem:[%s166 + $0xd8] sm:$0xff]
      %v202 = vld [vmem:[%s166 + $0xe0] sm:$0xff]
      %v203 = vld [vmem:[%s166 + $0xe8] sm:$0xff]
      %v204 = vld [vmem:[%s166 + $0xf0] sm:$0xff]
      %v205 = vld [vmem:[%s166 + $0xf8] sm:$0xff]
      %v206 = vld [vmem:[%s1] sm:$0xff]
      %v207 = vld [vmem:[%s1 + $0x8] sm:$0xff]
      %v208 = vld [vmem:[%s1 + $0x10] sm:$0xff]
      %v209 = vld [vmem:[%s1 + $0x18] sm:$0xff]
      %v210 = vld [vmem:[%s1 + $0x20] sm:$0xff]
      %v211 = vld [vmem:[%s1 + $0x28] sm:$0xff]
      %v212 = vld [vmem:[%s1 + $0x30] sm:$0xff]
      %v213 = vld [vmem:[%s1 + $0x38] sm:$0xff]
      %v214 = vld [vmem:[%s1 + $0x40] sm:$0xff]
      %v215 = vld [vmem:[%s1 + $0x48] sm:$0xff]
      %v216 = vld [vmem:[%s1 + $0x50] sm:$0xff]
      %v217 = vld [vmem:[%s1 + $0x58] sm:$0xff]
      %v218 = vld [vmem:[%s1 + $0x60] sm:$0xff]
      %v219 = vld [vmem:[%s1 + $0x68] sm:$0xff]
      %v220 = vld [vmem:[%s1 + $0x70] sm:$0xff]
      %v221 = vld [vmem:[%s1 + $0x78] sm:$0xff]
      %v222 = vld [vmem:[%s2] sm:$0x1]
      %v224 = vlaneseq
      %v225 = vshrl.u32 %v224, 7
      %v226 = vsub.s32 0, %v225
      %v227 = vrot.slane %v222, %v226
      %229 = vmatprep.subr.mxu0 0.0
      %230 = vmatpush1.msra.mxu0 %v206
      %231 = vmatprep.subr.mxu0 0.0
      %232 = vmatpush1.msra.mxu0 %v207
      %233 = vmatprep.subr.mxu0 0.0
      %234 = vmatpush1.msra.mxu0 %v208
      %235 = vmatprep.subr.mxu0 0.0
      %236 = vmatpush1.msra.mxu0 %v209
      %237 = vmatprep.subr.mxu0 0.0
      %238 = vmatpush1.msra.mxu0 %v210
      %239 = vmatprep.subr.mxu0 0.0
      %240 = vmatpush1.msra.mxu0 %v211
      %241 = vmatprep.subr.mxu0 0.0
      %242 = vmatpush1.msra.mxu0 %v212
      %243 = vmatprep.subr.mxu0 0.0
      %244 = vmatpush1.msra.mxu0 %v213
      %245 = vmatprep.subr.mxu0 0.0
      %246 = vmatpush1.msra.mxu0 %v214
      %247 = vmatprep.subr.mxu0 0.0
      %248 = vmatpush1.msra.mxu0 %v215
      %249 = vmatprep.subr.mxu0 0.0
      %250 = vmatpush1.msra.mxu0 %v216
      %251 = vmatprep.subr.mxu0 0.0
      %252 = vmatpush1.msra.mxu0 %v217
      %253 = vmatprep.subr.mxu0 0.0
      %254 = vmatpush1.msra.mxu0 %v218
      %255 = vmatprep.subr.mxu0 0.0
      %256 = vmatpush1.msra.mxu0 %v219
      %257 = vmatprep.subr.mxu0 0.0
      %258 = vmatpush1.msra.mxu0 %v220
      %259 = vmatprep.subr.mxu0 0.0
      %260 = vmatpush1.msra.mxu0 %v221
      %261 = vmatprep.subr.mxu0 0.0
      %262 = vmatpush1.msra.mxu0 0.0
      %263 = vmatprep.subr.mxu0 0.0
      %264 = vmatpush1.msra.mxu0 0.0
      %265 = vmatprep.subr.mxu0 0.0
      %266 = vmatpush1.msra.mxu0 0.0
      %267 = vmatprep.subr.mxu0 0.0
      %268 = vmatpush1.msra.mxu0 0.0
      %269 = vmatprep.subr.mxu0 0.0
      %270 = vmatpush1.msra.mxu0 0.0
      %271 = vmatprep.subr.mxu0 0.0
      %272 = vmatpush1.msra.mxu0 0.0
      %273 = vmatprep.subr.mxu0 0.0
      %274 = vmatpush1.msra.mxu0 0.0
      %275 = vmatprep.subr.mxu0 0.0
      %276 = vmatpush1.msra.mxu0 0.0
      %277 = vmatprep.subr.mxu0 0.0
      %278 = vmatpush1.msra.mxu0 0.0
      %279 = vmatprep.subr.mxu0 0.0
      %280 = vmatpush1.msra.mxu0 0.0
      %281 = vmatprep.subr.mxu0 0.0
      %282 = vmatpush1.msra.mxu0 0.0
      %283 = vmatprep.subr.mxu0 0.0
      %284 = vmatpush1.msra.mxu0 0.0
      %285 = vmatprep.subr.mxu0 0.0
      %286 = vmatpush1.msra.mxu0 0.0
      %287 = vmatprep.subr.mxu0 0.0
      %288 = vmatpush1.msra.mxu0 0.0
      %289 = vmatprep.subr.mxu0 0.0
      %290 = vmatpush1.msra.mxu0 0.0
      %291 = vmatprep.subr.mxu0 0.0
      %292 = vmatpush1.msra.mxu0 0.0
      %293 = vmatprep.mubr.f32.mxu0 0.0
      %294 = vmatmul.mubr.f32.gmra.mrb[0].mxu0 %v174
      %v295 = vpop.f32.mrb[0].mxu0
      %v296 = vadd.f32 %v227, %v295
      %v297 = vpop.f32.mrb[0].mxu0
      %298 = vmatprep.mubr.f32.mxu0 0.0
      %299 = vmatmul.mubr.f32.gmra.mrb[0].mxu0 %v175
      %v300 = vpop.f32.mrb[0].mxu0
      %v301 = vadd.f32 %v227, %v300
      %v302 = vpop.f32.mrb[0].mxu0
      %303 = vmatprep.mubr.f32.mxu0 0.0
      %304 = vmatmul.mubr.f32.gmra.mrb[0].mxu0 %v176
      %v305 = vpop.f32.mrb[0].mxu0
      %v306 = vadd.f32 %v227, %v305
      %v307 = vpop.f32.mrb[0].mxu0
      %308 = vmatprep.mubr.f32.mxu0 0.0
      %309 = vmatmul.mubr.f32.gmra.mrb[0].mxu0 %v177
      %v310 = vpop.f32.mrb[0].mxu0
      %v311 = vadd.f32 %v227, %v310
      %v312 = vpop.f32.mrb[0].mxu0
      %313 = vmatprep.mubr.f32.mxu0 0.0
      %314 = vmatmul.mubr.f32.gmra.mrb[0].mxu0 %v178
      %v315 = vpop.f32.mrb[0].mxu0
      %v316 = vadd.f32 %v227, %v315
      %v317 = vpop.f32.mrb[0].mxu0
      %318 = vmatprep.mubr.f32.mxu0 0.0
      %319 = vmatmul.mubr.f32.gmra.mrb[0].mxu0 %v179
      %v320 = vpop.f32.mrb[0].mxu0
      %v321 = vadd.f32 %v227, %v320
      %v322 = vpop.f32.mrb[0].mxu0
      %323 = vmatprep.mubr.f32.mxu0 0.0
      %324 = vmatmul.mubr.f32.gmra.mrb[0].mxu0 %v180
      %v325 = vpop.f32.mrb[0].mxu0
      %v326 = vadd.f32 %v227, %v325
      %v327 = vpop.f32.mrb[0].mxu0
      %328 = vmatprep.mubr.f32.mxu0 0.0
      %329 = vmatmul.mubr.f32.gmra.mrb[0].mxu0 %v181
      %v330 = vpop.f32.mrb[0].mxu0
      %v331 = vadd.f32 %v227, %v330
      %v332 = vpop.f32.mrb[0].mxu0
      %333 = vmatprep.mubr.f32.mxu0 0.0
      %334 = vmatmul.mubr.f32.gmra.mrb[0].mxu0 %v182
      %v335 = vpop.f32.mrb[0].mxu0
      %v336 = vadd.f32 %v227, %v335
      %v337 = vpop.f32.mrb[0].mxu0
      %338 = vmatprep.mubr.f32.mxu0 0.0
      %339 = vmatmul.mubr.f32.gmra.mrb[0].mxu0 %v183
      %v340 = vpop.f32.mrb[0].mxu0
      %v341 = vadd.f32 %v227, %v340
      %v342 = vpop.f32.mrb[0].mxu0
      %343 = vmatprep.mubr.f32.mxu0 0.0
      %344 = vmatmul.mubr.f32.gmra.mrb[0].mxu0 %v184
      %v345 = vpop.f32.mrb[0].mxu0
      %v346 = vadd.f32 %v227, %v345
      %v347 = vpop.f32.mrb[0].mxu0
      %348 = vmatprep.mubr.f32.mxu0 0.0
      %349 = vmatmul.mubr.f32.gmra.mrb[0].mxu0 %v185
      %v350 = vpop.f32.mrb[0].mxu0
      %v351 = vadd.f32 %v227, %v350
      %v352 = vpop.f32.mrb[0].mxu0
      %353 = vmatprep.mubr.f32.mxu0 0.0
      %354 = vmatmul.mubr.f32.gmra.mrb[0].mxu0 %v186
      %v355 = vpop.f32.mrb[0].mxu0
      %v356 = vadd.f32 %v227, %v355
      %v357 = vpop.f32.mrb[0].mxu0
      %358 = vmatprep.mubr.f32.mxu0 0.0
      %359 = vmatmul.mubr.f32.gmra.mrb[0].mxu0 %v187
      %v360 = vpop.f32.mrb[0].mxu0
      %v361 = vadd.f32 %v227, %v360
      %v362 = vpop.f32.mrb[0].mxu0
      %363 = vmatprep.mubr.f32.mxu0 0.0
      %364 = vmatmul.mubr.f32.gmra.mrb[0].mxu0 %v188
      %v365 = vpop.f32.mrb[0].mxu0
      %v366 = vadd.f32 %v227, %v365
      %v367 = vpop.f32.mrb[0].mxu0
      %368 = vmatprep.mubr.f32.mxu0 0.0
      %369 = vmatmul.mubr.f32.gmra.mrb[0].mxu0 %v189
      %v370 = vpop.f32.mrb[0].mxu0
      %v371 = vadd.f32 %v227, %v370
      %v372 = vpop.f32.mrb[0].mxu0
      %373 = vmatprep.mubr.f32.mxu0 0.0
      %374 = vmatmul.mubr.f32.gmra.mrb[0].mxu0 %v190
      %v375 = vpop.f32.mrb[0].mxu0
      %v376 = vadd.f32 %v227, %v375
      %v377 = vpop.f32.mrb[0].mxu0
      %378 = vmatprep.mubr.f32.mxu0 0.0
      %379 = vmatmul.mubr.f32.gmra.mrb[0].mxu0 %v191
      %v380 = vpop.f32.mrb[0].mxu0
      %v381 = vadd.f32 %v227, %v380
      %v382 = vpop.f32.mrb[0].mxu0
      %383 = vmatprep.mubr.f32.mxu0 0.0
      %384 = vmatmul.mubr.f32.gmra.mrb[0].mxu0 %v192
      %v385 = vpop.f32.mrb[0].mxu0
      %v386 = vadd.f32 %v227, %v385
      %v387 = vpop.f32.mrb[0].mxu0
      %388 = vmatprep.mubr.f32.mxu0 0.0
      %389 = vmatmul.mubr.f32.gmra.mrb[0].mxu0 %v193
      %v390 = vpop.f32.mrb[0].mxu0
      %v391 = vadd.f32 %v227, %v390
      %v392 = vpop.f32.mrb[0].mxu0
      %393 = vmatprep.mubr.f32.mxu0 0.0
      %394 = vmatmul.mubr.f32.gmra.mrb[0].mxu0 %v194
      %v395 = vpop.f32.mrb[0].mxu0
      %v396 = vadd.f32 %v227, %v395
      %v397 = vpop.f32.mrb[0].mxu0
      %398 = vmatprep.mubr.f32.mxu0 0.0
      %399 = vmatmul.mubr.f32.gmra.mrb[0].mxu0 %v195
      %v400 = vpop.f32.mrb[0].mxu0
      %v401 = vadd.f32 %v227, %v400
      %v402 = vpop.f32.mrb[0].mxu0
      %403 = vmatprep.mubr.f32.mxu0 0.0
      %404 = vmatmul.mubr.f32.gmra.mrb[0].mxu0 %v196
      %v405 = vpop.f32.mrb[0].mxu0
      %v406 = vadd.f32 %v227, %v405
      %v407 = vpop.f32.mrb[0].mxu0
      %408 = vmatprep.mubr.f32.mxu0 0.0
      %409 = vmatmul.mubr.f32.gmra.mrb[0].mxu0 %v197
      %v410 = vpop.f32.mrb[0].mxu0
      %v411 = vadd.f32 %v227, %v410
      %v412 = vpop.f32.mrb[0].mxu0
      %413 = vmatprep.mubr.f32.mxu0 0.0
      %414 = vmatmul.mubr.f32.gmra.mrb[0].mxu0 %v198
      %v415 = vpop.f32.mrb[0].mxu0
      %v416 = vadd.f32 %v227, %v415
      %v417 = vpop.f32.mrb[0].mxu0
      %418 = vmatprep.mubr.f32.mxu0 0.0
      %419 = vmatmul.mubr.f32.gmra.mrb[0].mxu0 %v199
      %v420 = vpop.f32.mrb[0].mxu0
      %v421 = vadd.f32 %v227, %v420
      %v422 = vpop.f32.mrb[0].mxu0
      %423 = vmatprep.mubr.f32.mxu0 0.0
      %424 = vmatmul.mubr.f32.gmra.mrb[0].mxu0 %v200
      %v425 = vpop.f32.mrb[0].mxu0
      %v426 = vadd.f32 %v227, %v425
      %v427 = vpop.f32.mrb[0].mxu0
      %428 = vmatprep.mubr.f32.mxu0 0.0
      %429 = vmatmul.mubr.f32.gmra.mrb[0].mxu0 %v201
      %v430 = vpop.f32.mrb[0].mxu0
      %v431 = vadd.f32 %v227, %v430
      %v432 = vpop.f32.mrb[0].mxu0
      %433 = vmatprep.mubr.f32.mxu0 0.0
      %434 = vmatmul.mubr.f32.gmra.mrb[0].mxu0 %v202
      %v435 = vpop.f32.mrb[0].mxu0
      %v436 = vadd.f32 %v227, %v435
      %v437 = vpop.f32.mrb[0].mxu0
      %438 = vmatprep.mubr.f32.mxu0 0.0
      %439 = vmatmul.mubr.f32.gmra.mrb[0].mxu0 %v203
      %v440 = vpop.f32.mrb[0].mxu0
      %v441 = vadd.f32 %v227, %v440
      %v442 = vpop.f32.mrb[0].mxu0
      %443 = vmatprep.mubr.f32.mxu0 0.0
      %444 = vmatmul.mubr.f32.gmra.mrb[0].mxu0 %v204
      %v445 = vpop.f32.mrb[0].mxu0
      %v446 = vadd.f32 %v227, %v445
      %v447 = vpop.f32.mrb[0].mxu0
      %448 = vmatprep.mubr.f32.mxu0 0.0
      %449 = vmatmul.mubr.f32.gmra.mrb[0].mxu0 %v205
      %v450 = vpop.f32.mrb[0].mxu0
      %v451 = vadd.f32 %v227, %v450
      %v452 = vpop.f32.mrb[0].mxu0
      %453 = vdwg.mxu0
      %v454 = vmax.f32 %v296, 0.0
      %v455 = vmax.f32 %v301, 0.0
      %v456 = vmax.f32 %v306, 0.0
      %v457 = vmax.f32 %v311, 0.0
      %v458 = vmax.f32 %v316, 0.0
      %v459 = vmax.f32 %v321, 0.0
      %v460 = vmax.f32 %v326, 0.0
      %v461 = vmax.f32 %v331, 0.0
      %v462 = vmax.f32 %v336, 0.0
      %v463 = vmax.f32 %v341, 0.0
      %v464 = vmax.f32 %v346, 0.0
      %v465 = vmax.f32 %v351, 0.0
      %v466 = vmax.f32 %v356, 0.0
      %v467 = vmax.f32 %v361, 0.0
      %v468 = vmax.f32 %v366, 0.0
      %v469 = vmax.f32 %v371, 0.0
      %v470 = vmax.f32 %v376, 0.0
      %v471 = vmax.f32 %v381, 0.0
      %v472 = vmax.f32 %v386, 0.0
      %v473 = vmax.f32 %v391, 0.0
      %v474 = vmax.f32 %v396, 0.0
      %v475 = vmax.f32 %v401, 0.0
      %v476 = vmax.f32 %v406, 0.0
      %v477 = vmax.f32 %v411, 0.0
      %v478 = vmax.f32 %v416, 0.0
      %v479 = vmax.f32 %v421, 0.0
      %v480 = vmax.f32 %v426, 0.0
      %v481 = vmax.f32 %v431, 0.0
      %v482 = vmax.f32 %v436, 0.0
      %v483 = vmax.f32 %v441, 0.0
      %v484 = vmax.f32 %v446, 0.0
      %v485 = vmax.f32 %v451, 0.0
      %486 = vst [vmem:[%s172] sm:$0xff] %v454
      %487 = vst [vmem:[%s172 + $0x8] sm:$0xff] %v455
      %488 = vst [vmem:[%s172 + $0x10] sm:$0xff] %v456
      %489 = vst [vmem:[%s172 + $0x18] sm:$0xff] %v457
      %490 = vst [vmem:[%s172 + $0x20] sm:$0xff] %v458
      %491 = vst [vmem:[%s172 + $0x28] sm:$0xff] %v459
      %492 = vst [vmem:[%s172 + $0x30] sm:$0xff] %v460
      %493 = vst [vmem:[%s172 + $0x38] sm:$0xff] %v461
      %494 = vst [vmem:[%s172 + $0x40] sm:$0xff] %v462
      %495 = vst [vmem:[%s172 + $0x48] sm:$0xff] %v463
      %496 = vst [vmem:[%s172 + $0x50] sm:$0xff] %v464
      %497 = vst [vmem:[%s172 + $0x58] sm:$0xff] %v465
      %498 = vst [vmem:[%s172 + $0x60] sm:$0xff] %v466
      %499 = vst [vmem:[%s172 + $0x68] sm:$0xff] %v467
      %500 = vst [vmem:[%s172 + $0x70] sm:$0xff] %v468
      %501 = vst [vmem:[%s172 + $0x78] sm:$0xff] %v469
      %502 = vst [vmem:[%s172 + $0x80] sm:$0xff] %v470
      %503 = vst [vmem:[%s172 + $0x88] sm:$0xff] %v471
      %504 = vst [vmem:[%s172 + $0x90] sm:$0xff] %v472
      %505 = vst [vmem:[%s172 + $0x98] sm:$0xff] %v473
      %506 = vst [vmem:[%s172 + $0xa0] sm:$0xff] %v474
      %507 = vst [vmem:[%s172 + $0xa8] sm:$0xff] %v475
      %508 = vst [vmem:[%s172 + $0xb0] sm:$0xff] %v476
      %509 = vst [vmem:[%s172 + $0xb8] sm:$0xff] %v477
      %510 = vst [vmem:[%s172 + $0xc0] sm:$0xff] %v478
      %511 = vst [vmem:[%s172 + $0xc8] sm:$0xff] %v479
      %512 = vst [vmem:[%s172 + $0xd0] sm:$0xff] %v480
      %513 = vst [vmem:[%s172 + $0xd8] sm:$0xff] %v481
      %514 = vst [vmem:[%s172 + $0xe0] sm:$0xff] %v482
      %515 = vst [vmem:[%s172 + $0xe8] sm:$0xff] %v483
      %516 = vst [vmem:[%s172 + $0xf0] sm:$0xff] %v484
      %517 = vst [vmem:[%s172 + $0xf8] sm:$0xff] %v485
      %s518 = smul.u32 32, %s14
      %p519 = scmp.lt.s32.totalorder %s518, 63
      %s520 = scalar_select %p519, %s518, 63
      %s521 = smul.addr %s520, 8
      %s522 = scalar_lea.vmem %s3, %s521
      // Predicated region
      $region33: #{onnx_parser_forward.3} parent=31 // pred_check
        %p523 = pneg %p100
      $region34: #{onnx_parser_forward.3} parent=31 // pred_check_branch
        %525 = sbr.rel (%p523) target = $region36
      $region35: #{onnx_parser_forward.3} parent=31 // pred_region
        %s526 = smul.u32 32, %s14
      $region36: #{onnx_parser_forward.3} parent=31 // pred_fallthru
        _
    $region32: #{onnx_parser_forward.3} parent=5 // pred_fallthru
      _
    %p527 = scmp.le.s32.totalorder 2, %s9
    // Predicated region
    $region37: #{onnx_parser_forward.3} parent=5 // pred_check
      %p528 = pneg %p527
    $region38: #{onnx_parser_forward.3} parent=5 // pred_check_branch
      %530 = sbr.rel (%p528) target = $region40
    $region39: #{onnx_parser_forward.3} parent=5 // pred_region
      %s531 = ssub.s32 %s9, 2
      // Predicated region
      $region41: #{onnx_parser_forward.3} parent=39 // pred_check
        %p532 = pneg %p106
      $region42: #{onnx_parser_forward.3} parent=39 // pred_check_branch
        %534 = sbr.rel (%p532) target = $region44
      $region43: #{onnx_parser_forward.3} parent=39 // pred_region
        %s535 = smul.u32 32, %s15
        %p536 = scmp.lt.s32.totalorder %s535, 63
        %s537 = scalar_select %p536, %s535, 63
        %s538 = smul.addr %s537, 8
        %s539 = scalar_lea.vmem %s3, %s538
      $region44: #{onnx_parser_forward.3} parent=39 // pred_fallthru
        _
    $region40: #{onnx_parser_forward.3} parent=5 // pred_fallthru
      _
  $region6: #{onnx_parser_forward.3} parent=0 // loop_footer
    %s13 = sadd.s32 1, %s9
  $region7: #{onnx_parser_forward.3} parent=0 // loop_footer_branch
    %8 = sbr.rel target = $region3
  $region8: #{onnx_parser_forward.3} parent=0 // loop_exit
    _

// kernel: onnx_parser_forward.4
$region0: #{onnx_parser_forward.4}
  #allocation0 [shape = 'u32[]', space=smem, size = 0x4, offset = 0x4, fixed_abs, tag = 'smem constant byte address 0x4 - core index']
  #allocation1 [shape = 'u32[144,128]{1,0:T(1,128)}', space=vmem, size = 0x12000, scoped, tag = 'internal scratch']
  %s0 = inlined_call_operand.vmem [shape: f32[128,128], index: 0, kind: input, shape index: {}]
  %s1 = inlined_call_operand.vmem [shape: f32[128,128], index: 1, kind: input, shape index: {}]
  %s2 = inlined_call_operand.vmem [shape: f32[1,128], index: 2, kind: input, shape index: {}]
  %s3 = inlined_call_operand.vmem [shape: f32[128,128], index: 3, kind: output, shape index: {}]
  %s4 = sld [smem:[#allocation0]]
  $region22: #{onnx_parser_forward.4} parent=0
    _
  %s6 = ssub.s32 1, %s4
  %s7 = scalar_select 0, %s6, %s4
  // Predicated region
  $region2: #{onnx_parser_forward.4} parent=0 // pred_check
    _
  $region3: #{onnx_parser_forward.4} parent=0 // pred_check_branch
    %9 = sbr.rel (0) target = $region5
  $region4: #{onnx_parser_forward.4} parent=0 // pred_region
    _
  $region5: #{onnx_parser_forward.4} parent=0 // pred_fallthru
    _
  // Predicated region
  $region6: #{onnx_parser_forward.4} parent=0 // pred_check
    _
  $region7: #{onnx_parser_forward.4} parent=0 // pred_check_branch
    %11 = sbr.rel (0) target = $region9
  $region8: #{onnx_parser_forward.4} parent=0 // pred_region
    _
  $region9: #{onnx_parser_forward.4} parent=0 // pred_fallthru
    _
  // Predicated region
  $region10: #{onnx_parser_forward.4} parent=0 // pred_check
    _
  $region11: #{onnx_parser_forward.4} parent=0 // pred_check_branch
    %13 = sbr.rel (0) target = $region13
  $region12: #{onnx_parser_forward.4} parent=0 // pred_region
    _
  $region13: #{onnx_parser_forward.4} parent=0 // pred_fallthru
    _
  %v14 = vld [vmem:[%s0] sm:$0xff]
  %v15 = vld [vmem:[%s0 + $0x8] sm:$0xff]
  %v16 = vld [vmem:[%s0 + $0x10] sm:$0xff]
  %v17 = vld [vmem:[%s0 + $0x18] sm:$0xff]
  %v18 = vld [vmem:[%s0 + $0x20] sm:$0xff]
  %v19 = vld [vmem:[%s0 + $0x28] sm:$0xff]
  %v20 = vld [vmem:[%s0 + $0x30] sm:$0xff]
  %v21 = vld [vmem:[%s0 + $0x38] sm:$0xff]
  %v22 = vld [vmem:[%s0 + $0x40] sm:$0xff]
  %v23 = vld [vmem:[%s0 + $0x48] sm:$0xff]
  %v24 = vld [vmem:[%s0 + $0x50] sm:$0xff]
  %v25 = vld [vmem:[%s0 + $0x58] sm:$0xff]
  %v26 = vld [vmem:[%s0 + $0x60] sm:$0xff]
  %v27 = vld [vmem:[%s0 + $0x68] sm:$0xff]
  %v28 = vld [vmem:[%s0 + $0x70] sm:$0xff]
  %v29 = vld [vmem:[%s0 + $0x78] sm:$0xff]
  %v30 = vld [vmem:[%s1] sm:$0xff]
  %v31 = vld [vmem:[%s1 + $0x8] sm:$0xff]
  %v32 = vld [vmem:[%s1 + $0x10] sm:$0xff]
  %v33 = vld [vmem:[%s1 + $0x18] sm:$0xff]
  %v34 = vld [vmem:[%s1 + $0x20] sm:$0xff]
  %v35 = vld [vmem:[%s1 + $0x28] sm:$0xff]
  %v36 = vld [vmem:[%s1 + $0x30] sm:$0xff]
  %v37 = vld [vmem:[%s1 + $0x38] sm:$0xff]
  %v38 = vld [vmem:[%s1 + $0x40] sm:$0xff]
  %v39 = vld [vmem:[%s1 + $0x48] sm:$0xff]
  %v40 = vld [vmem:[%s1 + $0x50] sm:$0xff]
  %v41 = vld [vmem:[%s1 + $0x58] sm:$0xff]
  %v42 = vld [vmem:[%s1 + $0x60] sm:$0xff]
  %v43 = vld [vmem:[%s1 + $0x68] sm:$0xff]
  %v44 = vld [vmem:[%s1 + $0x70] sm:$0xff]
  %v45 = vld [vmem:[%s1 + $0x78] sm:$0xff]
  %v46 = vld [vmem:[%s2] sm:$0x1]
  %v48 = vlaneseq
  %v49 = vshrl.u32 %v48, 7
  %v50 = vsub.s32 0, %v49
  %v51 = vrot.slane %v46, %v50
  %53 = vmatprep.subr.mxu0 0.0
  %54 = vmatpush1.msra.mxu0 %v30
  %55 = vmatprep.subr.mxu0 0.0
  %56 = vmatpush1.msra.mxu0 %v31
  %57 = vmatprep.subr.mxu0 0.0
  %58 = vmatpush1.msra.mxu0 %v32
  %59 = vmatprep.subr.mxu0 0.0
  %60 = vmatpush1.msra.mxu0 %v33
  %61 = vmatprep.subr.mxu0 0.0
  %62 = vmatpush1.msra.mxu0 %v34
  %63 = vmatprep.subr.mxu0 0.0
  %64 = vmatpush1.msra.mxu0 %v35
  %65 = vmatprep.subr.mxu0 0.0
  %66 = vmatpush1.msra.mxu0 %v36
  %67 = vmatprep.subr.mxu0 0.0
  %68 = vmatpush1.msra.mxu0 %v37
  %69 = vmatprep.subr.mxu0 0.0
  %70 = vmatpush1.msra.mxu0 %v38
  %71 = vmatprep.subr.mxu0 0.0
  %72 = vmatpush1.msra.mxu0 %v39
  %73 = vmatprep.subr.mxu0 0.0
  %74 = vmatpush1.msra.mxu0 %v40
  %75 = vmatprep.subr.mxu0 0.0
  %76 = vmatpush1.msra.mxu0 %v41
  %77 = vmatprep.subr.mxu0 0.0
  %78 = vmatpush1.msra.mxu0 %v42
  %79 = vmatprep.subr.mxu0 0.0
  %80 = vmatpush1.msra.mxu0 %v43
  %81 = vmatprep.subr.mxu0 0.0
  %82 = vmatpush1.msra.mxu0 %v44
  %83 = vmatprep.subr.mxu0 0.0
  %84 = vmatpush1.msra.mxu0 %v45
  %85 = vmatprep.subr.mxu0 0.0
  %86 = vmatpush1.msra.mxu0 0.0
  %87 = vmatprep.subr.mxu0 0.0
  %88 = vmatpush1.msra.mxu0 0.0
  %89 = vmatprep.subr.mxu0 0.0
  %90 = vmatpush1.msra.mxu0 0.0
  %91 = vmatprep.subr.mxu0 0.0
  %92 = vmatpush1.msra.mxu0 0.0
  %93 = vmatprep.subr.mxu0 0.0
  %94 = vmatpush1.msra.mxu0 0.0
  %95 = vmatprep.subr.mxu0 0.0
  %96 = vmatpush1.msra.mxu0 0.0
  %97 = vmatprep.subr.mxu0 0.0
  %98 = vmatpush1.msra.mxu0 0.0
  %99 = vmatprep.subr.mxu0 0.0
  %100 = vmatpush1.msra.mxu0 0.0
  %101 = vmatprep.subr.mxu0 0.0
  %102 = vmatpush1.msra.mxu0 0.0
  %103 = vmatprep.subr.mxu0 0.0
  %104 = vmatpush1.msra.mxu0 0.0
  %105 = vmatprep.subr.mxu0 0.0
  %106 = vmatpush1.msra.mxu0 0.0
  %107 = vmatprep.subr.mxu0 0.0
  %108 = vmatpush1.msra.mxu0 0.0
  %109 = vmatprep.subr.mxu0 0.0
  %110 = vmatpush1.msra.mxu0 0.0
  %111 = vmatprep.subr.mxu0 0.0
  %112 = vmatpush1.msra.mxu0 0.0
  %113 = vmatprep.subr.mxu0 0.0
  %114 = vmatpush1.msra.mxu0 0.0
  %115 = vmatprep.subr.mxu0 0.0
  %116 = vmatpush1.msra.mxu0 0.0
  %117 = vmatprep.mubr.f32.mxu0 0.0
  %118 = vmatmul.mubr.f32.gmra.mrb[0].mxu0 %v14
  %v119 = vpop.f32.mrb[0].mxu0
  %v120 = vadd.f32 %v51, %v119
  %v121 = vpop.f32.mrb[0].mxu0
  %122 = vmatprep.mubr.f32.mxu0 0.0
  %123 = vmatmul.mubr.f32.gmra.mrb[0].mxu0 %v15
  %v124 = vpop.f32.mrb[0].mxu0
  %v125 = vadd.f32 %v51, %v124
  %v126 = vpop.f32.mrb[0].mxu0
  %127 = vmatprep.mubr.f32.mxu0 0.0
  %128 = vmatmul.mubr.f32.gmra.mrb[0].mxu0 %v16
  %v129 = vpop.f32.mrb[0].mxu0
  %v130 = vadd.f32 %v51, %v129
  %v131 = vpop.f32.mrb[0].mxu0
  %132 = vmatprep.mubr.f32.mxu0 0.0
  %133 = vmatmul.mubr.f32.gmra.mrb[0].mxu0 %v17
  %v134 = vpop.f32.mrb[0].mxu0
  %v135 = vadd.f32 %v51, %v134
  %v136 = vpop.f32.mrb[0].mxu0
  %137 = vmatprep.mubr.f32.mxu0 0.0
  %138 = vmatmul.mubr.f32.gmra.mrb[0].mxu0 %v18
  %v139 = vpop.f32.mrb[0].mxu0
  %v140 = vadd.f32 %v51, %v139
  %v141 = vpop.f32.mrb[0].mxu0
  %142 = vmatprep.mubr.f32.mxu0 0.0
  %143 = vmatmul.mubr.f32.gmra.mrb[0].mxu0 %v19
  %v144 = vpop.f32.mrb[0].mxu0
  %v145 = vadd.f32 %v51, %v144
  %v146 = vpop.f32.mrb[0].mxu0
  %147 = vmatprep.mubr.f32.mxu0 0.0
  %148 = vmatmul.mubr.f32.gmra.mrb[0].mxu0 %v20
  %v149 = vpop.f32.mrb[0].mxu0
  %v150 = vadd.f32 %v51, %v149
  %v151 = vpop.f32.mrb[0].mxu0
  %152 = vmatprep.mubr.f32.mxu0 0.0
  %153 = vmatmul.mubr.f32.gmra.mrb[0].mxu0 %v21
  %v154 = vpop.f32.mrb[0].mxu0
  %v155 = vadd.f32 %v51, %v154
  %v156 = vpop.f32.mrb[0].mxu0
  %157 = vmatprep.mubr.f32.mxu0 0.0
  %158 = vmatmul.mubr.f32.gmra.mrb[0].mxu0 %v22
  %v159 = vpop.f32.mrb[0].mxu0
  %v160 = vadd.f32 %v51, %v159
  %v161 = vpop.f32.mrb[0].mxu0
  %162 = vmatprep.mubr.f32.mxu0 0.0
  %163 = vmatmul.mubr.f32.gmra.mrb[0].mxu0 %v23
  %v164 = vpop.f32.mrb[0].mxu0
  %v165 = vadd.f32 %v51, %v164
  %v166 = vpop.f32.mrb[0].mxu0
  %167 = vmatprep.mubr.f32.mxu0 0.0
  %168 = vmatmul.mubr.f32.gmra.mrb[0].mxu0 %v24
  %v169 = vpop.f32.mrb[0].mxu0
  %v170 = vadd.f32 %v51, %v169
  %v171 = vpop.f32.mrb[0].mxu0
  %172 = vmatprep.mubr.f32.mxu0 0.0
  %173 = vmatmul.mubr.f32.gmra.mrb[0].mxu0 %v25
  %v174 = vpop.f32.mrb[0].mxu0
  %v175 = vadd.f32 %v51, %v174
  %v176 = vpop.f32.mrb[0].mxu0
  %177 = vmatprep.mubr.f32.mxu0 0.0
  %178 = vmatmul.mubr.f32.gmra.mrb[0].mxu0 %v26
  %v179 = vpop.f32.mrb[0].mxu0
  %v180 = vadd.f32 %v51, %v179
  %v181 = vpop.f32.mrb[0].mxu0
  %182 = vmatprep.mubr.f32.mxu0 0.0
  %183 = vmatmul.mubr.f32.gmra.mrb[0].mxu0 %v27
  %v184 = vpop.f32.mrb[0].mxu0
  %v185 = vadd.f32 %v51, %v184
  %v186 = vpop.f32.mrb[0].mxu0
  %187 = vmatprep.mubr.f32.mxu0 0.0
  %188 = vmatmul.mubr.f32.gmra.mrb[0].mxu0 %v28
  %v189 = vpop.f32.mrb[0].mxu0
  %v190 = vadd.f32 %v51, %v189
  %v191 = vpop.f32.mrb[0].mxu0
  %192 = vmatprep.mubr.f32.mxu0 0.0
  %193 = vmatmul.mubr.f32.gmra.mrb[0].mxu0 %v29
  %v194 = vpop.f32.mrb[0].mxu0
  %v195 = vadd.f32 %v51, %v194
  %v196 = vpop.f32.mrb[0].mxu0
  %197 = vdwg.mxu0
  %v198 = vmax.f32 %v120, 0.0
  %v199 = vmax.f32 %v125, 0.0
  %v200 = vmax.f32 %v130, 0.0
  %v201 = vmax.f32 %v135, 0.0
  %v202 = vmax.f32 %v140, 0.0
  %v203 = vmax.f32 %v145, 0.0
  %v204 = vmax.f32 %v150, 0.0
  %v205 = vmax.f32 %v155, 0.0
  %v206 = vmax.f32 %v160, 0.0
  %v207 = vmax.f32 %v165, 0.0
  %v208 = vmax.f32 %v170, 0.0
  %v209 = vmax.f32 %v175, 0.0
  %v210 = vmax.f32 %v180, 0.0
  %v211 = vmax.f32 %v185, 0.0
  %v212 = vmax.f32 %v190, 0.0
  %v213 = vmax.f32 %v195, 0.0
  %214 = vst [vmem:[%s3] sm:$0xff] %v198
  %215 = vst [vmem:[%s3 + $0x8] sm:$0xff] %v199
  %216 = vst [vmem:[%s3 + $0x10] sm:$0xff] %v200
  %217 = vst [vmem:[%s3 + $0x18] sm:$0xff] %v201
  %218 = vst [vmem:[%s3 + $0x20] sm:$0xff] %v202
  %219 = vst [vmem:[%s3 + $0x28] sm:$0xff] %v203
  %220 = vst [vmem:[%s3 + $0x30] sm:$0xff] %v204
  %221 = vst [vmem:[%s3 + $0x38] sm:$0xff] %v205
  %222 = vst [vmem:[%s3 + $0x40] sm:$0xff] %v206
  %223 = vst [vmem:[%s3 + $0x48] sm:$0xff] %v207
  %224 = vst [vmem:[%s3 + $0x50] sm:$0xff] %v208
  %225 = vst [vmem:[%s3 + $0x58] sm:$0xff] %v209
  %226 = vst [vmem:[%s3 + $0x60] sm:$0xff] %v210
  %227 = vst [vmem:[%s3 + $0x68] sm:$0xff] %v211
  %228 = vst [vmem:[%s3 + $0x70] sm:$0xff] %v212
  %229 = vst [vmem:[%s3 + $0x78] sm:$0xff] %v213
  // Predicated region
  $region14: #{onnx_parser_forward.4} parent=0 // pred_check
    _
  $region15: #{onnx_parser_forward.4} parent=0 // pred_check_branch
    %231 = sbr.rel (0) target = $region17
  $region16: #{onnx_parser_forward.4} parent=0 // pred_region
    _
  $region17: #{onnx_parser_forward.4} parent=0 // pred_fallthru
    _
  // Predicated region
  $region18: #{onnx_parser_forward.4} parent=0 // pred_check
    _
  $region19: #{onnx_parser_forward.4} parent=0 // pred_check_branch
    %233 = sbr.rel (0) target = $region21
  $region20: #{onnx_parser_forward.4} parent=0 // pred_region
    _
  $region21: #{onnx_parser_forward.4} parent=0 // pred_fallthru
    _

// kernel: onnx_parser_forward.5
$region0: #{onnx_parser_forward.5}
  #allocation0 [shape = 'u32[]', space=smem, size = 0x4, offset = 0x4, fixed_abs, tag = 'smem constant byte address 0x4 - core index']
  #allocation1 [shape = 'u32[144,128]{1,0:T(1,128)}', space=vmem, size = 0x12000, scoped, tag = 'internal scratch']
  %s0 = inlined_call_operand.vmem [shape: f32[8,512], index: 0, kind: input, shape index: {}]
  %s1 = inlined_call_operand.vmem [shape: f32[512,128], index: 1, kind: input, shape index: {}]
  %s2 = inlined_call_operand.vmem [shape: f32[1,128], index: 2, kind: input, shape index: {}]
  %s3 = inlined_call_operand.vmem [shape: f32[128,128], index: 3, kind: input, shape index: {}]
  %s4 = inlined_call_operand.vmem [shape: f32[1,128], index: 4, kind: input, shape index: {}]
  %s5 = inlined_call_operand.vmem [shape: f32[8,128], index: 5, kind: output, shape index: {}]
  %s6 = sld [smem:[#allocation0]]
  $region30: #{onnx_parser_forward.5} parent=0
    _
  %s8 = ssub.s32 1, %s6
  %s9 = scalar_select 0, %s8, %s6
  // Predicated region
  $region2: #{onnx_parser_forward.5} parent=0 // pred_check
    _
  $region3: #{onnx_parser_forward.5} parent=0 // pred_check_branch
    %11 = sbr.rel (0) target = $region5
  $region4: #{onnx_parser_forward.5} parent=0 // pred_region
    _
  $region5: #{onnx_parser_forward.5} parent=0 // pred_fallthru
    _
  // Predicated region
  $region6: #{onnx_parser_forward.5} parent=0 // pred_check
    _
  $region7: #{onnx_parser_forward.5} parent=0 // pred_check_branch
    %13 = sbr.rel (0) target = $region9
  $region8: #{onnx_parser_forward.5} parent=0 // pred_region
    _
  $region9: #{onnx_parser_forward.5} parent=0 // pred_fallthru
    _
  // Predicated region
  $region10: #{onnx_parser_forward.5} parent=0 // pred_check
    _
  $region11: #{onnx_parser_forward.5} parent=0 // pred_check_branch
    %15 = sbr.rel (0) target = $region13
  $region12: #{onnx_parser_forward.5} parent=0 // pred_region
    _
  $region13: #{onnx_parser_forward.5} parent=0 // pred_fallthru
    _
  // Predicated region
  $region14: #{onnx_parser_forward.5} parent=0 // pred_check
    _
  $region15: #{onnx_parser_forward.5} parent=0 // pred_check_branch
    %17 = sbr.rel (0) target = $region17
  $region16: #{onnx_parser_forward.5} parent=0 // pred_region
    _
  $region17: #{onnx_parser_forward.5} parent=0 // pred_fallthru
    _
  // Predicated region
  $region18: #{onnx_parser_forward.5} parent=0 // pred_check
    _
  $region19: #{onnx_parser_forward.5} parent=0 // pred_check_branch
    %19 = sbr.rel (0) target = $region21
  $region20: #{onnx_parser_forward.5} parent=0 // pred_region
    _
  $region21: #{onnx_parser_forward.5} parent=0 // pred_fallthru
    _
  %v20 = vld [vmem:[%s0] sm:$0xff]
  %v21 = vld [vmem:[%s0 + $0x8] sm:$0xff]
  %v22 = vld [vmem:[%s0 + $0x10] sm:$0xff]
  %v23 = vld [vmem:[%s0 + $0x18] sm:$0xff]
  %v24 = vld [vmem:[%s1] sm:$0xff]
  %v25 = vld [vmem:[%s1 + $0x8] sm:$0xff]
  %v26 = vld [vmem:[%s1 + $0x10] sm:$0xff]
  %v27 = vld [vmem:[%s1 + $0x18] sm:$0xff]
  %v28 = vld [vmem:[%s1 + $0x20] sm:$0xff]
  %v29 = vld [vmem:[%s1 + $0x28] sm:$0xff]
  %v30 = vld [vmem:[%s1 + $0x30] sm:$0xff]
  %v31 = vld [vmem:[%s1 + $0x38] sm:$0xff]
  %v32 = vld [vmem:[%s1 + $0x40] sm:$0xff]
  %v33 = vld [vmem:[%s1 + $0x48] sm:$0xff]
  %v34 = vld [vmem:[%s1 + $0x50] sm:$0xff]
  %v35 = vld [vmem:[%s1 + $0x58] sm:$0xff]
  %v36 = vld [vmem:[%s1 + $0x60] sm:$0xff]
  %v37 = vld [vmem:[%s1 + $0x68] sm:$0xff]
  %v38 = vld [vmem:[%s1 + $0x70] sm:$0xff]
  %v39 = vld [vmem:[%s1 + $0x78] sm:$0xff]
  %v40 = vld [vmem:[%s1 + $0x80] sm:$0xff]
  %v41 = vld [vmem:[%s1 + $0x88] sm:$0xff]
  %v42 = vld [vmem:[%s1 + $0x90] sm:$0xff]
  %v43 = vld [vmem:[%s1 + $0x98] sm:$0xff]
  %v44 = vld [vmem:[%s1 + $0xa0] sm:$0xff]
  %v45 = vld [vmem:[%s1 + $0xa8] sm:$0xff]
  %v46 = vld [vmem:[%s1 + $0xb0] sm:$0xff]
  %v47 = vld [vmem:[%s1 + $0xb8] sm:$0xff]
  %v48 = vld [vmem:[%s1 + $0xc0] sm:$0xff]
  %v49 = vld [vmem:[%s1 + $0xc8] sm:$0xff]
  %v50 = vld [vmem:[%s1 + $0xd0] sm:$0xff]
  %v51 = vld [vmem:[%s1 + $0xd8] sm:$0xff]
  %v52 = vld [vmem:[%s1 + $0xe0] sm:$0xff]
  %v53 = vld [vmem:[%s1 + $0xe8] sm:$0xff]
  %v54 = vld [vmem:[%s1 + $0xf0] sm:$0xff]
  %v55 = vld [vmem:[%s1 + $0xf8] sm:$0xff]
  %v56 = vld [vmem:[%s1 + $0x100] sm:$0xff]
  %v57 = vld [vmem:[%s1 + $0x108] sm:$0xff]
  %v58 = vld [vmem:[%s1 + $0x110] sm:$0xff]
  %v59 = vld [vmem:[%s1 + $0x118] sm:$0xff]
  %v60 = vld [vmem:[%s1 + $0x120] sm:$0xff]
  %v61 = vld [vmem:[%s1 + $0x128] sm:$0xff]
  %v62 = vld [vmem:[%s1 + $0x130] sm:$0xff]
  %v63 = vld [vmem:[%s1 + $0x138] sm:$0xff]
  %v64 = vld [vmem:[%s1 + $0x140] sm:$0xff]
  %v65 = vld [vmem:[%s1 + $0x148] sm:$0xff]
  %v66 = vld [vmem:[%s1 + $0x150] sm:$0xff]
  %v67 = vld [vmem:[%s1 + $0x158] sm:$0xff]
  %v68 = vld [vmem:[%s1 + $0x160] sm:$0xff]
  %v69 = vld [vmem:[%s1 + $0x168] sm:$0xff]
  %v70 = vld [vmem:[%s1 + $0x170] sm:$0xff]
  %v71 = vld [vmem:[%s1 + $0x178] sm:$0xff]
  %v72 = vld [vmem:[%s1 + $0x180] sm:$0xff]
  %v73 = vld [vmem:[%s1 + $0x188] sm:$0xff]
  %v74 = vld [vmem:[%s1 + $0x190] sm:$0xff]
  %v75 = vld [vmem:[%s1 + $0x198] sm:$0xff]
  %v76 = vld [vmem:[%s1 + $0x1a0] sm:$0xff]
  %v77 = vld [vmem:[%s1 + $0x1a8] sm:$0xff]
  %v78 = vld [vmem:[%s1 + $0x1b0] sm:$0xff]
  %v79 = vld [vmem:[%s1 + $0x1b8] sm:$0xff]
  %v80 = vld [vmem:[%s1 + $0x1c0] sm:$0xff]
  %v81 = vld [vmem:[%s1 + $0x1c8] sm:$0xff]
  %v82 = vld [vmem:[%s1 + $0x1d0] sm:$0xff]
  %v83 = vld [vmem:[%s1 + $0x1d8] sm:$0xff]
  %v84 = vld [vmem:[%s1 + $0x1e0] sm:$0xff]
  %v85 = vld [vmem:[%s1 + $0x1e8] sm:$0xff]
  %v86 = vld [vmem:[%s1 + $0x1f0] sm:$0xff]
  %v87 = vld [vmem:[%s1 + $0x1f8] sm:$0xff]
  %v88 = vld [vmem:[%s2] sm:$0x1]
  %v90 = vlaneseq
  %v91 = vshrl.u32 %v90, 7
  %v92 = vsub.s32 0, %v91
  %v93 = vrot.slane %v88, %v92
  %95 = vmatprep.subr.mxu0 0.0
  %96 = vmatpush1.msra.mxu0 %v24
  %97 = vmatprep.subr.mxu0 0.0
  %98 = vmatpush1.msra.mxu0 %v25
  %99 = vmatprep.subr.mxu0 0.0
  %100 = vmatpush1.msra.mxu0 %v26
  %101 = vmatprep.subr.mxu0 0.0
  %102 = vmatpush1.msra.mxu0 %v27
  %103 = vmatprep.subr.mxu0 0.0
  %104 = vmatpush1.msra.mxu0 %v28
  %105 = vmatprep.subr.mxu0 0.0
  %106 = vmatpush1.msra.mxu0 %v29
  %107 = vmatprep.subr.mxu0 0.0
  %108 = vmatpush1.msra.mxu0 %v30
  %109 = vmatprep.subr.mxu0 0.0
  %110 = vmatpush1.msra.mxu0 %v31
  %111 = vmatprep.subr.mxu0 0.0
  %112 = vmatpush1.msra.mxu0 %v32
  %113 = vmatprep.subr.mxu0 0.0
  %114 = vmatpush1.msra.mxu0 %v33
  %115 = vmatprep.subr.mxu0 0.0
  %116 = vmatpush1.msra.mxu0 %v34
  %117 = vmatprep.subr.mxu0 0.0
  %118 = vmatpush1.msra.mxu0 %v35
  %119 = vmatprep.subr.mxu0 0.0
  %120 = vmatpush1.msra.mxu0 %v36
  %121 = vmatprep.subr.mxu0 0.0
  %122 = vmatpush1.msra.mxu0 %v37
  %123 = vmatprep.subr.mxu0 0.0
  %124 = vmatpush1.msra.mxu0 %v38
  %125 = vmatprep.subr.mxu0 0.0
  %126 = vmatpush1.msra.mxu0 %v39
  %127 = vmatprep.subr.mxu0 0.0
  %128 = vmatpush1.msra.mxu0 %v40
  %129 = vmatprep.subr.mxu0 0.0
  %130 = vmatpush1.msra.mxu0 %v41
  %131 = vmatprep.subr.mxu0 0.0
  %132 = vmatpush1.msra.mxu0 %v42
  %133 = vmatprep.subr.mxu0 0.0
  %134 = vmatpush1.msra.mxu0 %v43
  %135 = vmatprep.subr.mxu0 0.0
  %136 = vmatpush1.msra.mxu0 %v44
  %137 = vmatprep.subr.mxu0 0.0
  %138 = vmatpush1.msra.mxu0 %v45
  %139 = vmatprep.subr.mxu0 0.0
  %140 = vmatpush1.msra.mxu0 %v46
  %141 = vmatprep.subr.mxu0 0.0
  %142 = vmatpush1.msra.mxu0 %v47
  %143 = vmatprep.subr.mxu0 0.0
  %144 = vmatpush1.msra.mxu0 %v48
  %145 = vmatprep.subr.mxu0 0.0
  %146 = vmatpush1.msra.mxu0 %v49
  %147 = vmatprep.subr.mxu0 0.0
  %148 = vmatpush1.msra.mxu0 %v50
  %149 = vmatprep.subr.mxu0 0.0
  %150 = vmatpush1.msra.mxu0 %v51
  %151 = vmatprep.subr.mxu0 0.0
  %152 = vmatpush1.msra.mxu0 %v52
  %153 = vmatprep.subr.mxu0 0.0
  %154 = vmatpush1.msra.mxu0 %v53
  %155 = vmatprep.subr.mxu0 0.0
  %156 = vmatpush1.msra.mxu0 %v54
  %157 = vmatprep.subr.mxu0 0.0
  %158 = vmatpush1.msra.mxu0 %v55
  %159 = vmatprep.mubr.f32.mxu0 %v21
  %160 = vmatmul.mubr.f32.gmra.mrb[0].mxu0 %v20
  %v161 = vpop.f32.mrb[0].mxu0
  %v162 = vadd.f32 %v93, %v161
  %v163 = vpop.f32.mrb[0].mxu0
  %164 = vdwg.mxu0
  %165 = vmatprep.subr.mxu0 0.0
  %166 = vmatpush1.msra.mxu0 %v56
  %167 = vmatprep.subr.mxu0 0.0
  %168 = vmatpush1.msra.mxu0 %v57
  %169 = vmatprep.subr.mxu0 0.0
  %170 = vmatpush1.msra.mxu0 %v58
  %171 = vmatprep.subr.mxu0 0.0
  %172 = vmatpush1.msra.mxu0 %v59
  %173 = vmatprep.subr.mxu0 0.0
  %174 = vmatpush1.msra.mxu0 %v60
  %175 = vmatprep.subr.mxu0 0.0
  %176 = vmatpush1.msra.mxu0 %v61
  %177 = vmatprep.subr.mxu0 0.0
  %178 = vmatpush1.msra.mxu0 %v62
  %179 = vmatprep.subr.mxu0 0.0
  %180 = vmatpush1.msra.mxu0 %v63
  %181 = vmatprep.subr.mxu0 0.0
  %182 = vmatpush1.msra.mxu0 %v64
  %183 = vmatprep.subr.mxu0 0.0
  %184 = vmatpush1.msra.mxu0 %v65
  %185 = vmatprep.subr.mxu0 0.0
  %186 = vmatpush1.msra.mxu0 %v66
  %187 = vmatprep.subr.mxu0 0.0
  %188 = vmatpush1.msra.mxu0 %v67
  %189 = vmatprep.subr.mxu0 0.0
  %190 = vmatpush1.msra.mxu0 %v68
  %191 = vmatprep.subr.mxu0 0.0
  %192 = vmatpush1.msra.mxu0 %v69
  %193 = vmatprep.subr.mxu0 0.0
  %194 = vmatpush1.msra.mxu0 %v70
  %195 = vmatprep.subr.mxu0 0.0
  %196 = vmatpush1.msra.mxu0 %v71
  %197 = vmatprep.subr.mxu0 0.0
  %198 = vmatpush1.msra.mxu0 %v72
  %199 = vmatprep.subr.mxu0 0.0
  %200 = vmatpush1.msra.mxu0 %v73
  %201 = vmatprep.subr.mxu0 0.0
  %202 = vmatpush1.msra.mxu0 %v74
  %203 = vmatprep.subr.mxu0 0.0
  %204 = vmatpush1.msra.mxu0 %v75
  %205 = vmatprep.subr.mxu0 0.0
  %206 = vmatpush1.msra.mxu0 %v76
  %207 = vmatprep.subr.mxu0 0.0
  %208 = vmatpush1.msra.mxu0 %v77
  %209 = vmatprep.subr.mxu0 0.0
  %210 = vmatpush1.msra.mxu0 %v78
  %211 = vmatprep.subr.mxu0 0.0
  %212 = vmatpush1.msra.mxu0 %v79
  %213 = vmatprep.subr.mxu0 0.0
  %214 = vmatpush1.msra.mxu0 %v80
  %215 = vmatprep.subr.mxu0 0.0
  %216 = vmatpush1.msra.mxu0 %v81
  %217 = vmatprep.subr.mxu0 0.0
  %218 = vmatpush1.msra.mxu0 %v82
  %219 = vmatprep.subr.mxu0 0.0
  %220 = vmatpush1.msra.mxu0 %v83
  %221 = vmatprep.subr.mxu0 0.0
  %222 = vmatpush1.msra.mxu0 %v84
  %223 = vmatprep.subr.mxu0 0.0
  %224 = vmatpush1.msra.mxu0 %v85
  %225 = vmatprep.subr.mxu0 0.0
  %226 = vmatpush1.msra.mxu0 %v86
  %227 = vmatprep.subr.mxu0 0.0
  %228 = vmatpush1.msra.mxu0 %v87
  %229 = vmatprep.mubr.f32.mxu0 %v23
  %230 = vmatmul.mubr.f32.gmra.mrb[0].mxu0 %v22
  %v231 = vpop.f32.mrb[0].mxu0
  %v232 = vadd.f32 %v162, %v231
  %v233 = vpop.f32.mrb[0].mxu0
  %234 = vdwg.mxu0
  %v235 = vmax.f32 %v232, 0.0
  %v236 = vld [vmem:[%s3] sm:$0xff]
  %v237 = vld [vmem:[%s3 + $0x8] sm:$0xff]
  %v238 = vld [vmem:[%s3 + $0x10] sm:$0xff]
  %v239 = vld [vmem:[%s3 + $0x18] sm:$0xff]
  %v240 = vld [vmem:[%s3 + $0x20] sm:$0xff]
  %v241 = vld [vmem:[%s3 + $0x28] sm:$0xff]
  %v242 = vld [vmem:[%s3 + $0x30] sm:$0xff]
  %v243 = vld [vmem:[%s3 + $0x38] sm:$0xff]
  %v244 = vld [vmem:[%s3 + $0x40] sm:$0xff]
  %v245 = vld [vmem:[%s3 + $0x48] sm:$0xff]
  %v246 = vld [vmem:[%s3 + $0x50] sm:$0xff]
  %v247 = vld [vmem:[%s3 + $0x58] sm:$0xff]
  %v248 = vld [vmem:[%s3 + $0x60] sm:$0xff]
  %v249 = vld [vmem:[%s3 + $0x68] sm:$0xff]
  %v250 = vld [vmem:[%s3 + $0x70] sm:$0xff]
  %v251 = vld [vmem:[%s3 + $0x78] sm:$0xff]
  %v252 = vld [vmem:[%s4] sm:$0x1]
  %v254 = vlaneseq
  %v255 = vshrl.u32 %v254, 7
  %v256 = vsub.s32 0, %v255
  %v257 = vrot.slane %v252, %v256
  %259 = vmatprep.subr.mxu0 0.0
  %260 = vmatpush1.msra.mxu0 %v236
  %261 = vmatprep.subr.mxu0 0.0
  %262 = vmatpush1.msra.mxu0 %v237
  %263 = vmatprep.subr.mxu0 0.0
  %264 = vmatpush1.msra.mxu0 %v238
  %265 = vmatprep.subr.mxu0 0.0
  %266 = vmatpush1.msra.mxu0 %v239
  %267 = vmatprep.subr.mxu0 0.0
  %268 = vmatpush1.msra.mxu0 %v240
  %269 = vmatprep.subr.mxu0 0.0
  %270 = vmatpush1.msra.mxu0 %v241
  %271 = vmatprep.subr.mxu0 0.0
  %272 = vmatpush1.msra.mxu0 %v242
  %273 = vmatprep.subr.mxu0 0.0
  %274 = vmatpush1.msra.mxu0 %v243
  %275 = vmatprep.subr.mxu0 0.0
  %276 = vmatpush1.msra.mxu0 %v244
  %277 = vmatprep.subr.mxu0 0.0
  %278 = vmatpush1.msra.mxu0 %v245
  %279 = vmatprep.subr.mxu0 0.0
  %280 = vmatpush1.msra.mxu0 %v246
  %281 = vmatprep.subr.mxu0 0.0
  %282 = vmatpush1.msra.mxu0 %v247
  %283 = vmatprep.subr.mxu0 0.0
  %284 = vmatpush1.msra.mxu0 %v248
  %285 = vmatprep.subr.mxu0 0.0
  %286 = vmatpush1.msra.mxu0 %v249
  %287 = vmatprep.subr.mxu0 0.0
  %288 = vmatpush1.msra.mxu0 %v250
  %289 = vmatprep.subr.mxu0 0.0
  %290 = vmatpush1.msra.mxu0 %v251
  %291 = vmatprep.subr.mxu0 0.0
  %292 = vmatpush1.msra.mxu0 0.0
  %293 = vmatprep.subr.mxu0 0.0
  %294 = vmatpush1.msra.mxu0 0.0
  %295 = vmatprep.subr.mxu0 0.0
  %296 = vmatpush1.msra.mxu0 0.0
  %297 = vmatprep.subr.mxu0 0.0
  %298 = vmatpush1.msra.mxu0 0.0
  %299 = vmatprep.subr.mxu0 0.0
  %300 = vmatpush1.msra.mxu0 0.0
  %301 = vmatprep.subr.mxu0 0.0
  %302 = vmatpush1.msra.mxu0 0.0
  %303 = vmatprep.subr.mxu0 0.0
  %304 = vmatpush1.msra.mxu0 0.0
  %305 = vmatprep.subr.mxu0 0.0
  %306 = vmatpush1.msra.mxu0 0.0
  %307 = vmatprep.subr.mxu0 0.0
  %308 = vmatpush1.msra.mxu0 0.0
  %309 = vmatprep.subr.mxu0 0.0
  %310 = vmatpush1.msra.mxu0 0.0
  %311 = vmatprep.subr.mxu0 0.0
  %312 = vmatpush1.msra.mxu0 0.0
  %313 = vmatprep.subr.mxu0 0.0
  %314 = vmatpush1.msra.mxu0 0.0
  %315 = vmatprep.subr.mxu0 0.0
  %316 = vmatpush1.msra.mxu0 0.0
  %317 = vmatprep.subr.mxu0 0.0
  %318 = vmatpush1.msra.mxu0 0.0
  %319 = vmatprep.subr.mxu0 0.0
  %320 = vmatpush1.msra.mxu0 0.0
  %321 = vmatprep.subr.mxu0 0.0
  %322 = vmatpush1.msra.mxu0 0.0
  %323 = vmatprep.mubr.f32.mxu0 0.0
  %324 = vmatmul.mubr.f32.gmra.mrb[0].mxu0 %v235
  %v325 = vpop.f32.mrb[0].mxu0
  %v326 = vadd.f32 %v257, %v325
  %v327 = vpop.f32.mrb[0].mxu0
  %328 = vdwg.mxu0
  %329 = vst [vmem:[%s5] sm:$0xff] %v326
  // Predicated region
  $region22: #{onnx_parser_forward.5} parent=0 // pred_check
    _
  $region23: #{onnx_parser_forward.5} parent=0 // pred_check_branch
    %331 = sbr.rel (0) target = $region25
  $region24: #{onnx_parser_forward.5} parent=0 // pred_region
    _
  $region25: #{onnx_parser_forward.5} parent=0 // pred_fallthru
    _
  // Predicated region
  $region26: #{onnx_parser_forward.5} parent=0 // pred_check
    _
  $region27: #{onnx_parser_forward.5} parent=0 // pred_check_branch
    %333 = sbr.rel (0) target = $region29
  $region28: #{onnx_parser_forward.5} parent=0 // pred_region
    _
  $region29: #{onnx_parser_forward.5} parent=0 // pred_fallthru
    _

</llo_original>
